<compile_context>
chip_gen: v7x
topology: tpu7x:2x2x1
jax: 0.10.0
libtpu: 0.0.40
codegen_flags: <defaults>
</compile_context>

<pallas_src>
import math

import jax
import jax.numpy as jnp
from jax.experimental import pallas as pl
from jax.experimental.pallas import tpu as pltpu


def _choose_d_block(n, d, m1, m2, itemsize, vmem_budget_bytes, max_unroll):
    """Largest legal d-block fitting a (double-buffered) VMEM budget."""
    # bytes per local layer: x-slab + weight + bias + out-slab, x2 for double buffering
    per_d = 2 * (n * m1 + m1 * m2 + m2 + n * m2) * itemsize
    fit = min(max(1, vmem_budget_bytes // per_d), max_unroll)
    if d <= fit:
        return d                                  # block dim == full dim: always legal
    sub = max(8, 8 * (4 // max(itemsize, 1)))     # sublane multiple: 8 f32 / 16 bf16 / 32 i8
    blk = max(sub, (fit // sub) * sub)            # multiple of sublane count: always legal
    return min(blk, d)


def _make_kernel(d_block, with_bias):
    if with_bias:
        def kernel(x_ref, w_ref, b_ref, o_ref):
            # x_ref: (n, d_block, m1)  w_ref: (d_block, m1, m2)
            # b_ref: (d_block, 1, m2)  o_ref: (n, d_block, m2)
            for j in range(d_block):              # static unroll: one MXU matmul per layer
                acc = jnp.dot(x_ref[:, j, :], w_ref[j],
                              preferred_element_type=jnp.float32)
                acc = acc + b_ref[j].astype(jnp.float32)
                o_ref[:, j, :] = acc.astype(o_ref.dtype)
    else:
        def kernel(x_ref, w_ref, o_ref):
            for j in range(d_block):
                acc = jnp.dot(x_ref[:, j, :], w_ref[j],
                              preferred_element_type=jnp.float32)
                o_ref[:, j, :] = acc.astype(o_ref.dtype)
    return kernel


def locally_connected(x, weight, bias=None, *, d_block=None,
                      vmem_budget_bytes=8 * 1024 * 1024, max_unroll=64):
    """x: [n, d, m1], weight: [d, m1, m2], bias: [d, m2] or None -> [n, d, m2]."""
    n, d, m1 = x.shape
    d_w, m1_w, m2 = weight.shape
    assert d == d_w and m1 == m1_w, (x.shape, weight.shape)

    itemsize = jnp.dtype(x.dtype).itemsize
    if d_block is None:
        d_block = _choose_d_block(n, d, m1, m2, itemsize,
                                  vmem_budget_bytes, max_unroll)

    with_bias = bias is not None
    in_specs = [
        pl.BlockSpec((n, d_block, m1), lambda i: (0, i, 0)),
        pl.BlockSpec((d_block, m1, m2), lambda i: (i, 0, 0)),
    ]
    inputs = [x, weight]
    bytes_accessed = (x.size * itemsize
                      + weight.size * jnp.dtype(weight.dtype).itemsize
                      + n * d * m2 * itemsize)
    if with_bias:
        assert bias.shape == (d, m2), bias.shape
        b3 = bias.reshape(d, 1, m2)               # keep bias dtype; f32 cast in-kernel
        in_specs.append(pl.BlockSpec((d_block, 1, m2), lambda i: (i, 0, 0)))
        inputs.append(b3)
        bytes_accessed += bias.size * jnp.dtype(bias.dtype).itemsize

    return pl.pallas_call(
        _make_kernel(d_block, with_bias),
        out_shape=jax.ShapeDtypeStruct((n, d, m2), x.dtype),
        grid_spec=pltpu.PrefetchScalarGridSpec(
            num_scalar_prefetch=0,
            grid=(pl.cdiv(d, d_block),),
            in_specs=in_specs,
            out_specs=pl.BlockSpec((n, d_block, m2), lambda i: (0, i, 0)),
        ),
        compiler_params=pltpu.CompilerParams(
            dimension_semantics=("parallel",),    # lets v7x split d-blocks over 2 TCs
            vmem_limit_bytes=32 * 1024 * 1024,    # explicit, safe on v5e/v6e/v7x
        ),
        cost_estimate=pl.CostEstimate(
            flops=2 * n * d * m1 * m2,
            transcendentals=0,
            bytes_accessed=bytes_accessed,
        ),
    )(*inputs)


def init_params(key, num_linear, input_features, output_features, dtype=jnp.float32):
    """Matches nn.init.uniform_(-sqrt(1/m1), sqrt(1/m1)) deterministically."""
    bound = math.sqrt(1.0 / input_features)
    kw, kb = jax.random.split(key)
    weight = jax.random.uniform(
        kw, (num_linear, input_features, output_features),
        minval=-bound, maxval=bound, dtype=dtype)
    bias = jax.random.uniform(
        kb, (num_linear, output_features),
        minval=-bound, maxval=bound, dtype=dtype)
    return weight, bias


if __name__ == "__main__":
    # Small shapes consistent with the module: n=batch, d=num_linear, m1->m2
    n, d, m1, m2 = 8, 4, 16, 32

    key = jax.random.PRNGKey(0)
    k_x, k_p = jax.random.split(key)

    x = jax.random.normal(k_x, (n, d, m1), dtype=jnp.float32)
    weight, bias = init_params(k_p, d, m1, m2)

    out = jax.block_until_ready(locally_connected(x, weight, bias))
    out_nb = jax.block_until_ready(locally_connected(x, weight, None))

    # Pure-JAX reference (same semantics as the PyTorch forward)
    ref = jnp.einsum("ndm,dmk->ndk", x, weight) + bias[None, :, :]
    ref_nb = jnp.einsum("ndm,dmk->ndk", x, weight)

    assert out.shape == (n, d, m2)
    assert jnp.allclose(out, ref, atol=1e-5, rtol=1e-5)
    assert jnp.allclose(out_nb, ref_nb, atol=1e-5, rtol=1e-5)

    print("KERNEL_OK")
</pallas_src>

<mosaic_0001>
module attributes {stable_mosaic.version = 11 : i64} {
  func.func @kernel(%arg0: i32, %arg1: memref<8x4x16xf32, #tpu.memory_space<vmem>>, %arg2: memref<4x16x32xf32, #tpu.memory_space<vmem>>, %arg3: memref<4x1x32xf32, #tpu.memory_space<vmem>>, %arg4: memref<8x4x32xf32, #tpu.memory_space<vmem>>) attributes {dimension_semantics = [#tpu.dimension_semantics<parallel>], iteration_bounds = array<i64: 1>, scalar_prefetch = 0 : i64, scratch_operands = 0 : i64, tpu.core_type = #tpu.core_type<tc>, window_params = [{transform_indices = @transform_0, window_bounds = array<i64: 8, 4, 16>}, {transform_indices = @transform_1, window_bounds = array<i64: 4, 16, 32>}, {transform_indices = @transform_2, window_bounds = array<i64: 4, 1, 32>}, {transform_indices = @transform_3, window_bounds = array<i64: 8, 4, 32>}]} {
    %c0 = arith.constant 0 : index
    %c0_0 = arith.constant 0 : index
    %c0_1 = arith.constant 0 : index
    %0 = vector.load %arg1[%c0, %c0_0, %c0_1] : memref<8x4x16xf32, #tpu.memory_space<vmem>>, vector<8x1x16xf32>
    %1 = vector.shape_cast %0 : vector<8x1x16xf32> to vector<8x16xf32>
    %c0_2 = arith.constant 0 : index
    %c0_3 = arith.constant 0 : index
    %c0_4 = arith.constant 0 : index
    %2 = vector.load %arg2[%c0_2, %c0_3, %c0_4] : memref<4x16x32xf32, #tpu.memory_space<vmem>>, vector<1x16x32xf32>
    %3 = vector.shape_cast %2 : vector<1x16x32xf32> to vector<16x32xf32>
    %cst = arith.constant dense<0.000000e+00> : vector<8x32xf32>
    %4 = tpu.matmul %1, %3, %cst {dimension_numbers = #tpu.dot_dimension_numbers<[1], [0], [0], [1], [0, 0, 1, 1], [], []>} : vector<8x16xf32>, vector<16x32xf32>, vector<8x32xf32> -> vector<8x32xf32>
    %c0_5 = arith.constant 0 : index
    %c0_6 = arith.constant 0 : index
    %c0_7 = arith.constant 0 : index
    %5 = vector.load %arg3[%c0_5, %c0_6, %c0_7] : memref<4x1x32xf32, #tpu.memory_space<vmem>>, vector<1x1x32xf32>
    %6 = vector.shape_cast %5 : vector<1x1x32xf32> to vector<1x32xf32>
    %7 = vector.broadcast %6 : vector<1x32xf32> to vector<8x32xf32>
    %8 = arith.addf %4, %7 : vector<8x32xf32>
    %c0_8 = arith.constant 0 : index
    %c0_9 = arith.constant 0 : index
    %c0_10 = arith.constant 0 : index
    %9 = vector.load %arg4[%c0_8, %c0_9, %c0_10] : memref<8x4x32xf32, #tpu.memory_space<vmem>>, vector<8x1x32xf32>
    %10 = vector.shape_cast %9 : vector<8x1x32xf32> to vector<8x32xf32>
    %11 = vector.shape_cast %8 : vector<8x32xf32> to vector<8x1x32xf32>
    tpu.vector_store %arg4[%c0_8, %c0_9, %c0_10], %11 {strides = array<i32>} : memref<8x4x32xf32, #tpu.memory_space<vmem>>, vector<8x1x32xf32>,
    %c0_11 = arith.constant 0 : index
    %c1 = arith.constant 1 : index
    %c0_12 = arith.constant 0 : index
    %12 = vector.load %arg1[%c0_11, %c1, %c0_12] : memref<8x4x16xf32, #tpu.memory_space<vmem>>, vector<8x1x16xf32>
    %13 = vector.shape_cast %12 : vector<8x1x16xf32> to vector<8x16xf32>
    %c1_13 = arith.constant 1 : index
    %c0_14 = arith.constant 0 : index
    %c0_15 = arith.constant 0 : index
    %14 = vector.load %arg2[%c1_13, %c0_14, %c0_15] : memref<4x16x32xf32, #tpu.memory_space<vmem>>, vector<1x16x32xf32>
    %15 = vector.shape_cast %14 : vector<1x16x32xf32> to vector<16x32xf32>
    %cst_16 = arith.constant dense<0.000000e+00> : vector<8x32xf32>
    %16 = tpu.matmul %13, %15, %cst_16 {dimension_numbers = #tpu.dot_dimension_numbers<[1], [0], [0], [1], [0, 0, 1, 1], [], []>} : vector<8x16xf32>, vector<16x32xf32>, vector<8x32xf32> -> vector<8x32xf32>
    %c1_17 = arith.constant 1 : index
    %c0_18 = arith.constant 0 : index
    %c0_19 = arith.constant 0 : index
    %17 = vector.load %arg3[%c1_17, %c0_18, %c0_19] : memref<4x1x32xf32, #tpu.memory_space<vmem>>, vector<1x1x32xf32>
    %18 = vector.shape_cast %17 : vector<1x1x32xf32> to vector<1x32xf32>
    %19 = vector.broadcast %18 : vector<1x32xf32> to vector<8x32xf32>
    %20 = arith.addf %16, %19 : vector<8x32xf32>
    %c0_20 = arith.constant 0 : index
    %c1_21 = arith.constant 1 : index
    %c0_22 = arith.constant 0 : index
    %21 = vector.load %arg4[%c0_20, %c1_21, %c0_22] : memref<8x4x32xf32, #tpu.memory_space<vmem>>, vector<8x1x32xf32>
    %22 = vector.shape_cast %21 : vector<8x1x32xf32> to vector<8x32xf32>
    %23 = vector.shape_cast %20 : vector<8x32xf32> to vector<8x1x32xf32>
    tpu.vector_store %arg4[%c0_20, %c1_21, %c0_22], %23 {strides = array<i32>} : memref<8x4x32xf32, #tpu.memory_space<vmem>>, vector<8x1x32xf32>,
    %c0_23 = arith.constant 0 : index
    %c2 = arith.constant 2 : index
    %c0_24 = arith.constant 0 : index
    %24 = vector.load %arg1[%c0_23, %c2, %c0_24] : memref<8x4x16xf32, #tpu.memory_space<vmem>>, vector<8x1x16xf32>
    %25 = vector.shape_cast %24 : vector<8x1x16xf32> to vector<8x16xf32>
    %c2_25 = arith.constant 2 : index
    %c0_26 = arith.constant 0 : index
    %c0_27 = arith.constant 0 : index
    %26 = vector.load %arg2[%c2_25, %c0_26, %c0_27] : memref<4x16x32xf32, #tpu.memory_space<vmem>>, vector<1x16x32xf32>
    %27 = vector.shape_cast %26 : vector<1x16x32xf32> to vector<16x32xf32>
    %cst_28 = arith.constant dense<0.000000e+00> : vector<8x32xf32>
    %28 = tpu.matmul %25, %27, %cst_28 {dimension_numbers = #tpu.dot_dimension_numbers<[1], [0], [0], [1], [0, 0, 1, 1], [], []>} : vector<8x16xf32>, vector<16x32xf32>, vector<8x32xf32> -> vector<8x32xf32>
    %c2_29 = arith.constant 2 : index
    %c0_30 = arith.constant 0 : index
    %c0_31 = arith.constant 0 : index
    %29 = vector.load %arg3[%c2_29, %c0_30, %c0_31] : memref<4x1x32xf32, #tpu.memory_space<vmem>>, vector<1x1x32xf32>
    %30 = vector.shape_cast %29 : vector<1x1x32xf32> to vector<1x32xf32>
    %31 = vector.broadcast %30 : vector<1x32xf32> to vector<8x32xf32>
    %32 = arith.addf %28, %31 : vector<8x32xf32>
    %c0_32 = arith.constant 0 : index
    %c2_33 = arith.constant 2 : index
    %c0_34 = arith.constant 0 : index
    %33 = vector.load %arg4[%c0_32, %c2_33, %c0_34] : memref<8x4x32xf32, #tpu.memory_space<vmem>>, vector<8x1x32xf32>
    %34 = vector.shape_cast %33 : vector<8x1x32xf32> to vector<8x32xf32>
    %35 = vector.shape_cast %32 : vector<8x32xf32> to vector<8x1x32xf32>
    tpu.vector_store %arg4[%c0_32, %c2_33, %c0_34], %35 {strides = array<i32>} : memref<8x4x32xf32, #tpu.memory_space<vmem>>, vector<8x1x32xf32>,
    %c0_35 = arith.constant 0 : index
    %c3 = arith.constant 3 : index
    %c0_36 = arith.constant 0 : index
    %36 = vector.load %arg1[%c0_35, %c3, %c0_36] : memref<8x4x16xf32, #tpu.memory_space<vmem>>, vector<8x1x16xf32>
    %37 = vector.shape_cast %36 : vector<8x1x16xf32> to vector<8x16xf32>
    %c3_37 = arith.constant 3 : index
    %c0_38 = arith.constant 0 : index
    %c0_39 = arith.constant 0 : index
    %38 = vector.load %arg2[%c3_37, %c0_38, %c0_39] : memref<4x16x32xf32, #tpu.memory_space<vmem>>, vector<1x16x32xf32>
    %39 = vector.shape_cast %38 : vector<1x16x32xf32> to vector<16x32xf32>
    %cst_40 = arith.constant dense<0.000000e+00> : vector<8x32xf32>
    %40 = tpu.matmul %37, %39, %cst_40 {dimension_numbers = #tpu.dot_dimension_numbers<[1], [0], [0], [1], [0, 0, 1, 1], [], []>} : vector<8x16xf32>, vector<16x32xf32>, vector<8x32xf32> -> vector<8x32xf32>
    %c3_41 = arith.constant 3 : index
    %c0_42 = arith.constant 0 : index
    %c0_43 = arith.constant 0 : index
    %41 = vector.load %arg3[%c3_41, %c0_42, %c0_43] : memref<4x1x32xf32, #tpu.memory_space<vmem>>, vector<1x1x32xf32>
    %42 = vector.shape_cast %41 : vector<1x1x32xf32> to vector<1x32xf32>
    %43 = vector.broadcast %42 : vector<1x32xf32> to vector<8x32xf32>
    %44 = arith.addf %40, %43 : vector<8x32xf32>
    %c0_44 = arith.constant 0 : index
    %c3_45 = arith.constant 3 : index
    %c0_46 = arith.constant 0 : index
    %45 = vector.load %arg4[%c0_44, %c3_45, %c0_46] : memref<8x4x32xf32, #tpu.memory_space<vmem>>, vector<8x1x32xf32>
    %46 = vector.shape_cast %45 : vector<8x1x32xf32> to vector<8x32xf32>
    %47 = vector.shape_cast %44 : vector<8x32xf32> to vector<8x1x32xf32>
    tpu.vector_store %arg4[%c0_44, %c3_45, %c0_46], %47 {strides = array<i32>} : memref<8x4x32xf32, #tpu.memory_space<vmem>>, vector<8x1x32xf32>,
    return
  }
  func.func @transform_0(%arg0: i32) -> (i32, i32, i32) {
    %c0_i32 = arith.constant 0 : i32
    %c0_i32_0 = arith.constant 0 : i32
    %c0_i32_1 = arith.constant 0 : i32
    return %c0_i32, %arg0, %c0_i32_0 : i32, i32, i32
  }
  func.func @transform_1(%arg0: i32) -> (i32, i32, i32) {
    %c0_i32 = arith.constant 0 : i32
    %c0_i32_0 = arith.constant 0 : i32
    %c0_i32_1 = arith.constant 0 : i32
    return %arg0, %c0_i32, %c0_i32_0 : i32, i32, i32
  }
  func.func @transform_2(%arg0: i32) -> (i32, i32, i32) {
    %c0_i32 = arith.constant 0 : i32
    %c0_i32_0 = arith.constant 0 : i32
    %c0_i32_1 = arith.constant 0 : i32
    return %arg0, %c0_i32, %c0_i32_0 : i32, i32, i32
  }
  func.func @transform_3(%arg0: i32) -> (i32, i32, i32) {
    %c0_i32 = arith.constant 0 : i32
    %c0_i32_0 = arith.constant 0 : i32
    %c0_i32_1 = arith.constant 0 : i32
    return %c0_i32, %arg0, %c0_i32_0 : i32, i32, i32
  }
}

</mosaic_0001>

<llo_original>
// kernel: tpu_custom_call.1
$region0: #{tpu_custom_call.1}
  #allocation0 [shape = 'u32[]', space=smem, size = 0x4, offset = 0x4, fixed_abs, tag = 'smem constant byte address 0x4 - core index']
  #allocation1 [shape = 'u32[144,128]{1,0:T(1,128)}', space=vmem, size = 0x12000, scoped, tag = 'internal scratch']
  %s0 = inlined_call_operand.hbm [shape: f32[8,4,16], index: 0, kind: input, shape index: {}]
  %s1 = inlined_call_operand.hbm [shape: f32[4,16,32], index: 1, kind: input, shape index: {}]
  %s2 = inlined_call_operand.vmem [shape: f32[4,1,32], index: 2, kind: input, shape index: {}]
  %s3 = inlined_call_operand.hbm [shape: f32[8,4,32], index: 3, kind: output, shape index: {}]
  %s4 = sld [smem:[#allocation0]]
  $region30: #{tpu_custom_call.1} parent=0
    _
  %s6 = ssub.s32 1, %s4
  %s7 = scalar_select 0, %s6, %s4
  $region1: #{tpu_custom_call.1} parent=0
    #allocation2 [shape = 'u8[16384]{0}', space=vmem, size = 0x4000, scoped, tag = 'input window, operand 0, single buffered']
    #allocation3 [shape = 's32[1]{0}', space=sflag, size = 0x4, scoped, tag = 'scoped memory for tpu_custom_call.1']
    #allocation4 [shape = 's32[1]{0}', space=sflag, size = 0x4, scoped, tag = 'scoped memory for tpu_custom_call.1']
    #allocation5 [shape = 'u8[32768]{0}', space=vmem, size = 0x8000, scoped, tag = 'input window, operand 1, single buffered']
    #allocation6 [shape = 's32[1]{0}', space=sflag, size = 0x4, scoped, tag = 'scoped memory for tpu_custom_call.1']
    #allocation7 [shape = 'u8[16384]{0}', space=vmem, size = 0x4000, scoped, tag = 'output window, operand 0, single buffered']
    %8 = vsyncpa [#allocation3], 0
    %9 = vsyncpa [#allocation6], 0
    %10 = vsyncpa [#allocation4], 0
    // Predicated region
    $region2: #{tpu_custom_call.1} parent=1 // pred_check
      _
    $region3: #{tpu_custom_call.1} parent=1 // pred_check_branch
      %12 = sbr.rel (0) target = $region5
    $region4: #{tpu_custom_call.1} parent=1 // pred_region
      %s14 = ssub.s32 512, 512
      %15 = vsyncadd [#allocation3], %s14
      %s16 = sshll.u32 [#allocation2], 4
      %s17 = int_to_ptr.vmem [resolvable:$true] %s16
      %22 = dma.hbm_to_vmem [thread:$0]  %s0, 512, %s17, [#allocation3], 64, 64, 4
    $region5: #{tpu_custom_call.1} parent=1 // pred_fallthru
      _
    // Predicated region
    $region6: #{tpu_custom_call.1} parent=1 // pred_check
      _
    $region7: #{tpu_custom_call.1} parent=1 // pred_check_branch
      %24 = sbr.rel (0) target = $region9
    $region8: #{tpu_custom_call.1} parent=1 // pred_region
      %s26 = ssub.s32 1024, 1024
      %27 = vsyncadd [#allocation6], %s26
      %s28 = sshll.u32 [#allocation5], 4
      %s29 = int_to_ptr.vmem [resolvable:$true] %s28
      %34 = dma.hbm_to_vmem [thread:$0]  %s1, 1024, %s29, [#allocation6], 128, 128, 8
    $region9: #{tpu_custom_call.1} parent=1 // pred_fallthru
      _
    // Predicated region
    $region10: #{tpu_custom_call.1} parent=1 // pred_check
      _
    $region11: #{tpu_custom_call.1} parent=1 // pred_check_branch
      %36 = sbr.rel (0) target = $region13
    $region12: #{tpu_custom_call.1} parent=1 // pred_region
      _
    $region13: #{tpu_custom_call.1} parent=1 // pred_fallthru
      _
    // Predicated region
    $region14: #{tpu_custom_call.1} parent=1 // pred_check
      _
    $region15: #{tpu_custom_call.1} parent=1 // pred_check_branch
      %38 = sbr.rel (0) target = $region17
    $region16: #{tpu_custom_call.1} parent=1 // pred_region
      %39 = dma.done [#allocation3], 512
    $region17: #{tpu_custom_call.1} parent=1 // pred_fallthru
      _
    // Predicated region
    $region18: #{tpu_custom_call.1} parent=1 // pred_check
      _
    $region19: #{tpu_custom_call.1} parent=1 // pred_check_branch
      %41 = sbr.rel (0) target = $region21
    $region20: #{tpu_custom_call.1} parent=1 // pred_region
      %42 = dma.done [#allocation6], 1024
    $region21: #{tpu_custom_call.1} parent=1 // pred_fallthru
      _
    %v43 = vld [vmem:[#allocation2] sm:$0x1]
    %v44 = vld [vmem:[#allocation2 + $0x4] sm:$0x1]
    %v45 = vld [vmem:[#allocation2 + $0x8] sm:$0x1]
    %v46 = vld [vmem:[#allocation2 + $0xc] sm:$0x1]
    %v47 = vld [vmem:[#allocation2 + $0x10] sm:$0x1]
    %v48 = vld [vmem:[#allocation2 + $0x14] sm:$0x1]
    %v49 = vld [vmem:[#allocation2 + $0x18] sm:$0x1]
    %v50 = vld [vmem:[#allocation2 + $0x1c] sm:$0x1]
    %v51 = vld [vmem:[#allocation5] sm:$0xff]
    %v52 = vld [vmem:[#allocation5 + $0x8] sm:$0xff]
    %v53 = vld [vmem:[%s2] sm:$0x1]
    %v55 = vlaneseq
    %v56 = vshrl.u32 %v55, 7
    %v57 = vsub.s32 0, %v56
    %v58 = vrot.slane %v53, %v57
    %v68 = vrot.slane %v44, 7
    %vm69 = vcmask 1041409
    %v70 = vsel %vm69, %v68, %v43
    %v71 = vrot.slane %v45, 6
    %vm72 = vcmask 1042434
    %v73 = vsel %vm72, %v71, %v70
    %v74 = vrot.slane %v46, 5
    %vm75 = vcmask 1043459
    %v76 = vsel %vm75, %v74, %v73
    %v77 = vrot.slane %v47, 4
    %vm78 = vcmask 1044484
    %v79 = vsel %vm78, %v77, %v76
    %v80 = vrot.slane %v48, 3
    %vm81 = vcmask 1045509
    %v82 = vsel %vm81, %v80, %v79
    %v83 = vrot.slane %v49, 2
    %vm84 = vcmask 1046534
    %v85 = vsel %vm84, %v83, %v82
    %v86 = vrot.slane %v50, 1
    %vm87 = vcmask 1047559
    %v88 = vsel %vm87, %v86, %v85
    %vm89 = vcmask 130048
    %v90 = vsel %vm89, %v88, 0
    %92 = vmatprep.subr.mxu0 0.0
    %93 = vmatpush1.msra.mxu0 %v51
    %94 = vmatprep.subr.mxu0 0.0
    %95 = vmatpush1.msra.mxu0 %v52
    %96 = vmatprep.subr.mxu0 0.0
    %97 = vmatpush1.msra.mxu0 0.0
    %98 = vmatprep.subr.mxu0 0.0
    %99 = vmatpush1.msra.mxu0 0.0
    %100 = vmatprep.subr.mxu0 0.0
    %101 = vmatpush1.msra.mxu0 0.0
    %102 = vmatprep.subr.mxu0 0.0
    %103 = vmatpush1.msra.mxu0 0.0
    %104 = vmatprep.subr.mxu0 0.0
    %105 = vmatpush1.msra.mxu0 0.0
    %106 = vmatprep.subr.mxu0 0.0
    %107 = vmatpush1.msra.mxu0 0.0
    %108 = vmatprep.subr.mxu0 0.0
    %109 = vmatpush1.msra.mxu0 0.0
    %110 = vmatprep.subr.mxu0 0.0
    %111 = vmatpush1.msra.mxu0 0.0
    %112 = vmatprep.subr.mxu0 0.0
    %113 = vmatpush1.msra.mxu0 0.0
    %114 = vmatprep.subr.mxu0 0.0
    %115 = vmatpush1.msra.mxu0 0.0
    %116 = vmatprep.subr.mxu0 0.0
    %117 = vmatpush1.msra.mxu0 0.0
    %118 = vmatprep.subr.mxu0 0.0
    %119 = vmatpush1.msra.mxu0 0.0
    %120 = vmatprep.subr.mxu0 0.0
    %121 = vmatpush1.msra.mxu0 0.0
    %122 = vmatprep.subr.mxu0 0.0
    %123 = vmatpush1.msra.mxu0 0.0
    %124 = vmatprep.subr.mxu0 0.0
    %125 = vmatpush1.msra.mxu0 0.0
    %126 = vmatprep.subr.mxu0 0.0
    %127 = vmatpush1.msra.mxu0 0.0
    %128 = vmatprep.subr.mxu0 0.0
    %129 = vmatpush1.msra.mxu0 0.0
    %130 = vmatprep.subr.mxu0 0.0
    %131 = vmatpush1.msra.mxu0 0.0
    %132 = vmatprep.subr.mxu0 0.0
    %133 = vmatpush1.msra.mxu0 0.0
    %134 = vmatprep.subr.mxu0 0.0
    %135 = vmatpush1.msra.mxu0 0.0
    %136 = vmatprep.subr.mxu0 0.0
    %137 = vmatpush1.msra.mxu0 0.0
    %138 = vmatprep.subr.mxu0 0.0
    %139 = vmatpush1.msra.mxu0 0.0
    %140 = vmatprep.subr.mxu0 0.0
    %141 = vmatpush1.msra.mxu0 0.0
    %142 = vmatprep.subr.mxu0 0.0
    %143 = vmatpush1.msra.mxu0 0.0
    %144 = vmatprep.subr.mxu0 0.0
    %145 = vmatpush1.msra.mxu0 0.0
    %146 = vmatprep.subr.mxu0 0.0
    %147 = vmatpush1.msra.mxu0 0.0
    %148 = vmatprep.subr.mxu0 0.0
    %149 = vmatpush1.msra.mxu0 0.0
    %150 = vmatprep.subr.mxu0 0.0
    %151 = vmatpush1.msra.mxu0 0.0
    %152 = vmatprep.subr.mxu0 0.0
    %153 = vmatpush1.msra.mxu0 0.0
    %154 = vmatprep.subr.mxu0 0.0
    %155 = vmatpush1.msra.mxu0 0.0
    %156 = vmatprep.mubr.f32.mxu0 0.0
    %157 = vmatmul.mubr.f32.gmra.mrb[0].mxu0 %v90
    %v158 = vpop.f32.mrb[0].mxu0
    %v159 = vadd.f32 %v58, %v158
    %v160 = vpop.f32.mrb[0].mxu0
    %161 = vdwg.mxu0
    %v163 = vcombine.high %v159, %v159
    %v165 = vunpack.c.l.s4 1966171168
    %v166 = vunpack.c.0.s8 %v165
    %v167 = vlaneseq
    %v168 = vshrl.u32 %v167, 7
    %v169 = vsub.s32 %v166, %v168
    %v170 = vrot.slane %v159, %v169
    %v172 = vunpack.c.l.s4 1966171168
    %v173 = vunpack.c.0.s8 %v172
    %v174 = vlaneseq
    %v175 = vshrl.u32 %v174, 7
    %v176 = vsub.s32 %v173, %v175
    %v177 = vrot.slane %v163, %v176
    %v178 = vcombine.high %v170, %v170
    %v179 = vcombine.high %v177, %v177
    %v181 = vunpack.c.l.s4 1966171168
    %v182 = vunpack.c.0.s8 %v181
    %v183 = vlaneseq
    %v184 = vshrl.u32 %v183, 7
    %v185 = vsub.s32 %v182, %v184
    %v186 = vrot.slane %v170, %v185
    %v188 = vunpack.c.l.s4 1966171168
    %v189 = vunpack.c.0.s8 %v188
    %v190 = vlaneseq
    %v191 = vshrl.u32 %v190, 7
    %v192 = vsub.s32 %v189, %v191
    %v193 = vrot.slane %v177, %v192
    %v195 = vunpack.c.l.s4 1966171168
    %v196 = vunpack.c.0.s8 %v195
    %v197 = vlaneseq
    %v198 = vshrl.u32 %v197, 7
    %v199 = vsub.s32 %v196, %v198
    %v200 = vrot.slane %v178, %v199
    %v202 = vunpack.c.l.s4 1966171168
    %v203 = vunpack.c.0.s8 %v202
    %v204 = vlaneseq
    %v205 = vshrl.u32 %v204, 7
    %v206 = vsub.s32 %v203, %v205
    %v207 = vrot.slane %v179, %v206
    %v208 = vcombine.high %v186, %v186
    %v209 = vcombine.high %v193, %v193
    %v210 = vcombine.high %v200, %v200
    %v211 = vcombine.high %v207, %v207
    %vm220 = vcmask 253952
    %221 = vst.msk [vmem:[#allocation7] sm:$0x1] %vm220, %v186
    %222 = vst.msk [vmem:[#allocation7 + $0x4] sm:$0x1] %vm220, %v200
    %223 = vst.msk [vmem:[#allocation7 + $0x8] sm:$0x1] %vm220, %v208
    %224 = vst.msk [vmem:[#allocation7 + $0xc] sm:$0x1] %vm220, %v210
    %225 = vst.msk [vmem:[#allocation7 + $0x10] sm:$0x1] %vm220, %v193
    %226 = vst.msk [vmem:[#allocation7 + $0x14] sm:$0x1] %vm220, %v207
    %227 = vst.msk [vmem:[#allocation7 + $0x18] sm:$0x1] %vm220, %v209
    %228 = vst.msk [vmem:[#allocation7 + $0x1c] sm:$0x1] %vm220, %v211
    %v229 = vld [vmem:[#allocation2 + $0x1] sm:$0x1]
    %v230 = vld [vmem:[#allocation2 + $0x5] sm:$0x1]
    %v231 = vld [vmem:[#allocation2 + $0x9] sm:$0x1]
    %v232 = vld [vmem:[#allocation2 + $0xd] sm:$0x1]
    %v233 = vld [vmem:[#allocation2 + $0x11] sm:$0x1]
    %v234 = vld [vmem:[#allocation2 + $0x15] sm:$0x1]
    %v235 = vld [vmem:[#allocation2 + $0x19] sm:$0x1]
    %v236 = vld [vmem:[#allocation2 + $0x1d] sm:$0x1]
    %s237 = scalar_lea.vmem [#allocation5], 16
    %v238 = vld [vmem:[%s237] sm:$0xff]
    %v239 = vld [vmem:[%s237 + $0x8] sm:$0xff]
    %s240 = scalar_lea.vmem %s2, 1
    %v241 = vld [vmem:[%s240] sm:$0x1]
    %v243 = vlaneseq
    %v244 = vshrl.u32 %v243, 7
    %v245 = vsub.s32 0, %v244
    %v246 = vrot.slane %v241, %v245
    %v256 = vrot.slane %v230, 7
    %v257 = vsel %vm69, %v256, %v229
    %v258 = vrot.slane %v231, 6
    %v259 = vsel %vm72, %v258, %v257
    %v260 = vrot.slane %v232, 5
    %v261 = vsel %vm75, %v260, %v259
    %v262 = vrot.slane %v233, 4
    %v263 = vsel %vm78, %v262, %v261
    %v264 = vrot.slane %v234, 3
    %v265 = vsel %vm81, %v264, %v263
    %v266 = vrot.slane %v235, 2
    %v267 = vsel %vm84, %v266, %v265
    %v268 = vrot.slane %v236, 1
    %v269 = vsel %vm87, %v268, %v267
    %v270 = vsel %vm89, %v269, 0
    %272 = vmatprep.subr.mxu0 0.0
    %273 = vmatpush1.msra.mxu0 %v238
    %274 = vmatprep.subr.mxu0 0.0
    %275 = vmatpush1.msra.mxu0 %v239
    %276 = vmatprep.subr.mxu0 0.0
    %277 = vmatpush1.msra.mxu0 0.0
    %278 = vmatprep.subr.mxu0 0.0
    %279 = vmatpush1.msra.mxu0 0.0
    %280 = vmatprep.subr.mxu0 0.0
    %281 = vmatpush1.msra.mxu0 0.0
    %282 = vmatprep.subr.mxu0 0.0
    %283 = vmatpush1.msra.mxu0 0.0
    %284 = vmatprep.subr.mxu0 0.0
    %285 = vmatpush1.msra.mxu0 0.0
    %286 = vmatprep.subr.mxu0 0.0
    %287 = vmatpush1.msra.mxu0 0.0
    %288 = vmatprep.subr.mxu0 0.0
    %289 = vmatpush1.msra.mxu0 0.0
    %290 = vmatprep.subr.mxu0 0.0
    %291 = vmatpush1.msra.mxu0 0.0
    %292 = vmatprep.subr.mxu0 0.0
    %293 = vmatpush1.msra.mxu0 0.0
    %294 = vmatprep.subr.mxu0 0.0
    %295 = vmatpush1.msra.mxu0 0.0
    %296 = vmatprep.subr.mxu0 0.0
    %297 = vmatpush1.msra.mxu0 0.0
    %298 = vmatprep.subr.mxu0 0.0
    %299 = vmatpush1.msra.mxu0 0.0
    %300 = vmatprep.subr.mxu0 0.0
    %301 = vmatpush1.msra.mxu0 0.0
    %302 = vmatprep.subr.mxu0 0.0
    %303 = vmatpush1.msra.mxu0 0.0
    %304 = vmatprep.subr.mxu0 0.0
    %305 = vmatpush1.msra.mxu0 0.0
    %306 = vmatprep.subr.mxu0 0.0
    %307 = vmatpush1.msra.mxu0 0.0
    %308 = vmatprep.subr.mxu0 0.0
    %309 = vmatpush1.msra.mxu0 0.0
    %310 = vmatprep.subr.mxu0 0.0
    %311 = vmatpush1.msra.mxu0 0.0
    %312 = vmatprep.subr.mxu0 0.0
    %313 = vmatpush1.msra.mxu0 0.0
    %314 = vmatprep.subr.mxu0 0.0
    %315 = vmatpush1.msra.mxu0 0.0
    %316 = vmatprep.subr.mxu0 0.0
    %317 = vmatpush1.msra.mxu0 0.0
    %318 = vmatprep.subr.mxu0 0.0
    %319 = vmatpush1.msra.mxu0 0.0
    %320 = vmatprep.subr.mxu0 0.0
    %321 = vmatpush1.msra.mxu0 0.0
    %322 = vmatprep.subr.mxu0 0.0
    %323 = vmatpush1.msra.mxu0 0.0
    %324 = vmatprep.subr.mxu0 0.0
    %325 = vmatpush1.msra.mxu0 0.0
    %326 = vmatprep.subr.mxu0 0.0
    %327 = vmatpush1.msra.mxu0 0.0
    %328 = vmatprep.subr.mxu0 0.0
    %329 = vmatpush1.msra.mxu0 0.0
    %330 = vmatprep.subr.mxu0 0.0
    %331 = vmatpush1.msra.mxu0 0.0
    %332 = vmatprep.subr.mxu0 0.0
    %333 = vmatpush1.msra.mxu0 0.0
    %334 = vmatprep.subr.mxu0 0.0
    %335 = vmatpush1.msra.mxu0 0.0
    %336 = vmatprep.mubr.f32.mxu0 0.0
    %337 = vmatmul.mubr.f32.gmra.mrb[0].mxu0 %v270
    %v338 = vpop.f32.mrb[0].mxu0
    %v339 = vadd.f32 %v246, %v338
    %v340 = vpop.f32.mrb[0].mxu0
    %341 = vdwg.mxu0
    %v343 = vcombine.high %v339, %v339
    %v345 = vunpack.c.l.s4 1966171168
    %v346 = vunpack.c.0.s8 %v345
    %v347 = vlaneseq
    %v348 = vshrl.u32 %v347, 7
    %v349 = vsub.s32 %v346, %v348
    %v350 = vrot.slane %v339, %v349
    %v352 = vunpack.c.l.s4 1966171168
    %v353 = vunpack.c.0.s8 %v352
    %v354 = vlaneseq
    %v355 = vshrl.u32 %v354, 7
    %v356 = vsub.s32 %v353, %v355
    %v357 = vrot.slane %v343, %v356
    %v358 = vcombine.high %v350, %v350
    %v359 = vcombine.high %v357, %v357
    %v361 = vunpack.c.l.s4 1966171168
    %v362 = vunpack.c.0.s8 %v361
    %v363 = vlaneseq
    %v364 = vshrl.u32 %v363, 7
    %v365 = vsub.s32 %v362, %v364
    %v366 = vrot.slane %v350, %v365
    %v368 = vunpack.c.l.s4 1966171168
    %v369 = vunpack.c.0.s8 %v368
    %v370 = vlaneseq
    %v371 = vshrl.u32 %v370, 7
    %v372 = vsub.s32 %v369, %v371
    %v373 = vrot.slane %v357, %v372
    %v375 = vunpack.c.l.s4 1966171168
    %v376 = vunpack.c.0.s8 %v375
    %v377 = vlaneseq
    %v378 = vshrl.u32 %v377, 7
    %v379 = vsub.s32 %v376, %v378
    %v380 = vrot.slane %v358, %v379
    %v382 = vunpack.c.l.s4 1966171168
    %v383 = vunpack.c.0.s8 %v382
    %v384 = vlaneseq
    %v385 = vshrl.u32 %v384, 7
    %v386 = vsub.s32 %v383, %v385
    %v387 = vrot.slane %v359, %v386
    %v388 = vcombine.high %v366, %v366
    %v389 = vcombine.high %v373, %v373
    %v390 = vcombine.high %v380, %v380
    %v391 = vcombine.high %v387, %v387
    %400 = vst.msk [vmem:[#allocation7 + $0x1] sm:$0x1] %vm220, %v366
    %401 = vst.msk [vmem:[#allocation7 + $0x5] sm:$0x1] %vm220, %v380
    %402 = vst.msk [vmem:[#allocation7 + $0x9] sm:$0x1] %vm220, %v388
    %403 = vst.msk [vmem:[#allocation7 + $0xd] sm:$0x1] %vm220, %v390
    %404 = vst.msk [vmem:[#allocation7 + $0x11] sm:$0x1] %vm220, %v373
    %405 = vst.msk [vmem:[#allocation7 + $0x15] sm:$0x1] %vm220, %v387
    %406 = vst.msk [vmem:[#allocation7 + $0x19] sm:$0x1] %vm220, %v389
    %407 = vst.msk [vmem:[#allocation7 + $0x1d] sm:$0x1] %vm220, %v391
    %v408 = vld [vmem:[#allocation2 + $0x2] sm:$0x1]
    %v409 = vld [vmem:[#allocation2 + $0x6] sm:$0x1]
    %v410 = vld [vmem:[#allocation2 + $0xa] sm:$0x1]
    %v411 = vld [vmem:[#allocation2 + $0xe] sm:$0x1]
    %v412 = vld [vmem:[#allocation2 + $0x12] sm:$0x1]
    %v413 = vld [vmem:[#allocation2 + $0x16] sm:$0x1]
    %v414 = vld [vmem:[#allocation2 + $0x1a] sm:$0x1]
    %v415 = vld [vmem:[#allocation2 + $0x1e] sm:$0x1]
    %s416 = scalar_lea.vmem [#allocation5], 32
    %v417 = vld [vmem:[%s416] sm:$0xff]
    %v418 = vld [vmem:[%s416 + $0x8] sm:$0xff]
    %s419 = scalar_lea.vmem %s2, 2
    %v420 = vld [vmem:[%s419] sm:$0x1]
    %v422 = vlaneseq
    %v423 = vshrl.u32 %v422, 7
    %v424 = vsub.s32 0, %v423
    %v425 = vrot.slane %v420, %v424
    %v435 = vrot.slane %v409, 7
    %v436 = vsel %vm69, %v435, %v408
    %v437 = vrot.slane %v410, 6
    %v438 = vsel %vm72, %v437, %v436
    %v439 = vrot.slane %v411, 5
    %v440 = vsel %vm75, %v439, %v438
    %v441 = vrot.slane %v412, 4
    %v442 = vsel %vm78, %v441, %v440
    %v443 = vrot.slane %v413, 3
    %v444 = vsel %vm81, %v443, %v442
    %v445 = vrot.slane %v414, 2
    %v446 = vsel %vm84, %v445, %v444
    %v447 = vrot.slane %v415, 1
    %v448 = vsel %vm87, %v447, %v446
    %v449 = vsel %vm89, %v448, 0
    %451 = vmatprep.subr.mxu0 0.0
    %452 = vmatpush1.msra.mxu0 %v417
    %453 = vmatprep.subr.mxu0 0.0
    %454 = vmatpush1.msra.mxu0 %v418
    %455 = vmatprep.subr.mxu0 0.0
    %456 = vmatpush1.msra.mxu0 0.0
    %457 = vmatprep.subr.mxu0 0.0
    %458 = vmatpush1.msra.mxu0 0.0
    %459 = vmatprep.subr.mxu0 0.0
    %460 = vmatpush1.msra.mxu0 0.0
    %461 = vmatprep.subr.mxu0 0.0
    %462 = vmatpush1.msra.mxu0 0.0
    %463 = vmatprep.subr.mxu0 0.0
    %464 = vmatpush1.msra.mxu0 0.0
    %465 = vmatprep.subr.mxu0 0.0
    %466 = vmatpush1.msra.mxu0 0.0
    %467 = vmatprep.subr.mxu0 0.0
    %468 = vmatpush1.msra.mxu0 0.0
    %469 = vmatprep.subr.mxu0 0.0
    %470 = vmatpush1.msra.mxu0 0.0
    %471 = vmatprep.subr.mxu0 0.0
    %472 = vmatpush1.msra.mxu0 0.0
    %473 = vmatprep.subr.mxu0 0.0
    %474 = vmatpush1.msra.mxu0 0.0
    %475 = vmatprep.subr.mxu0 0.0
    %476 = vmatpush1.msra.mxu0 0.0
    %477 = vmatprep.subr.mxu0 0.0
    %478 = vmatpush1.msra.mxu0 0.0
    %479 = vmatprep.subr.mxu0 0.0
    %480 = vmatpush1.msra.mxu0 0.0
    %481 = vmatprep.subr.mxu0 0.0
    %482 = vmatpush1.msra.mxu0 0.0
    %483 = vmatprep.subr.mxu0 0.0
    %484 = vmatpush1.msra.mxu0 0.0
    %485 = vmatprep.subr.mxu0 0.0
    %486 = vmatpush1.msra.mxu0 0.0
    %487 = vmatprep.subr.mxu0 0.0
    %488 = vmatpush1.msra.mxu0 0.0
    %489 = vmatprep.subr.mxu0 0.0
    %490 = vmatpush1.msra.mxu0 0.0
    %491 = vmatprep.subr.mxu0 0.0
    %492 = vmatpush1.msra.mxu0 0.0
    %493 = vmatprep.subr.mxu0 0.0
    %494 = vmatpush1.msra.mxu0 0.0
    %495 = vmatprep.subr.mxu0 0.0
    %496 = vmatpush1.msra.mxu0 0.0
    %497 = vmatprep.subr.mxu0 0.0
    %498 = vmatpush1.msra.mxu0 0.0
    %499 = vmatprep.subr.mxu0 0.0
    %500 = vmatpush1.msra.mxu0 0.0
    %501 = vmatprep.subr.mxu0 0.0
    %502 = vmatpush1.msra.mxu0 0.0
    %503 = vmatprep.subr.mxu0 0.0
    %504 = vmatpush1.msra.mxu0 0.0
    %505 = vmatprep.subr.mxu0 0.0
    %506 = vmatpush1.msra.mxu0 0.0
    %507 = vmatprep.subr.mxu0 0.0
    %508 = vmatpush1.msra.mxu0 0.0
    %509 = vmatprep.subr.mxu0 0.0
    %510 = vmatpush1.msra.mxu0 0.0
    %511 = vmatprep.subr.mxu0 0.0
    %512 = vmatpush1.msra.mxu0 0.0
    %513 = vmatprep.subr.mxu0 0.0
    %514 = vmatpush1.msra.mxu0 0.0
    %515 = vmatprep.mubr.f32.mxu0 0.0
    %516 = vmatmul.mubr.f32.gmra.mrb[0].mxu0 %v449
    %v517 = vpop.f32.mrb[0].mxu0
    %v518 = vadd.f32 %v425, %v517
    %v519 = vpop.f32.mrb[0].mxu0
    %520 = vdwg.mxu0
    %v522 = vcombine.high %v518, %v518
    %v524 = vunpack.c.l.s4 1966171168
    %v525 = vunpack.c.0.s8 %v524
    %v526 = vlaneseq
    %v527 = vshrl.u32 %v526, 7
    %v528 = vsub.s32 %v525, %v527
    %v529 = vrot.slane %v518, %v528
    %v531 = vunpack.c.l.s4 1966171168
    %v532 = vunpack.c.0.s8 %v531
    %v533 = vlaneseq
    %v534 = vshrl.u32 %v533, 7
    %v535 = vsub.s32 %v532, %v534
    %v536 = vrot.slane %v522, %v535
    %v537 = vcombine.high %v529, %v529
    %v538 = vcombine.high %v536, %v536
    %v540 = vunpack.c.l.s4 1966171168
    %v541 = vunpack.c.0.s8 %v540
    %v542 = vlaneseq
    %v543 = vshrl.u32 %v542, 7
    %v544 = vsub.s32 %v541, %v543
    %v545 = vrot.slane %v529, %v544
    %v547 = vunpack.c.l.s4 1966171168
    %v548 = vunpack.c.0.s8 %v547
    %v549 = vlaneseq
    %v550 = vshrl.u32 %v549, 7
    %v551 = vsub.s32 %v548, %v550
    %v552 = vrot.slane %v536, %v551
    %v554 = vunpack.c.l.s4 1966171168
    %v555 = vunpack.c.0.s8 %v554
    %v556 = vlaneseq
    %v557 = vshrl.u32 %v556, 7
    %v558 = vsub.s32 %v555, %v557
    %v559 = vrot.slane %v537, %v558
    %v561 = vunpack.c.l.s4 1966171168
    %v562 = vunpack.c.0.s8 %v561
    %v563 = vlaneseq
    %v564 = vshrl.u32 %v563, 7
    %v565 = vsub.s32 %v562, %v564
    %v566 = vrot.slane %v538, %v565
    %v567 = vcombine.high %v545, %v545
    %v568 = vcombine.high %v552, %v552
    %v569 = vcombine.high %v559, %v559
    %v570 = vcombine.high %v566, %v566
    %579 = vst.msk [vmem:[#allocation7 + $0x2] sm:$0x1] %vm220, %v545
    %580 = vst.msk [vmem:[#allocation7 + $0x6] sm:$0x1] %vm220, %v559
    %581 = vst.msk [vmem:[#allocation7 + $0xa] sm:$0x1] %vm220, %v567
    %582 = vst.msk [vmem:[#allocation7 + $0xe] sm:$0x1] %vm220, %v569
    %583 = vst.msk [vmem:[#allocation7 + $0x12] sm:$0x1] %vm220, %v552
    %584 = vst.msk [vmem:[#allocation7 + $0x16] sm:$0x1] %vm220, %v566
    %585 = vst.msk [vmem:[#allocation7 + $0x1a] sm:$0x1] %vm220, %v568
    %586 = vst.msk [vmem:[#allocation7 + $0x1e] sm:$0x1] %vm220, %v570
    %v587 = vld [vmem:[#allocation2 + $0x3] sm:$0x1]
    %v588 = vld [vmem:[#allocation2 + $0x7] sm:$0x1]
    %v589 = vld [vmem:[#allocation2 + $0xb] sm:$0x1]
    %v590 = vld [vmem:[#allocation2 + $0xf] sm:$0x1]
    %v591 = vld [vmem:[#allocation2 + $0x13] sm:$0x1]
    %v592 = vld [vmem:[#allocation2 + $0x17] sm:$0x1]
    %v593 = vld [vmem:[#allocation2 + $0x1b] sm:$0x1]
    %v594 = vld [vmem:[#allocation2 + $0x1f] sm:$0x1]
    %s595 = scalar_lea.vmem [#allocation5], 48
    %v596 = vld [vmem:[%s595] sm:$0xff]
    %v597 = vld [vmem:[%s595 + $0x8] sm:$0xff]
    %s598 = scalar_lea.vmem %s2, 3
    %v599 = vld [vmem:[%s598] sm:$0x1]
    %v601 = vlaneseq
    %v602 = vshrl.u32 %v601, 7
    %v603 = vsub.s32 0, %v602
    %v604 = vrot.slane %v599, %v603
    %v614 = vrot.slane %v588, 7
    %v615 = vsel %vm69, %v614, %v587
    %v616 = vrot.slane %v589, 6
    %v617 = vsel %vm72, %v616, %v615
    %v618 = vrot.slane %v590, 5
    %v619 = vsel %vm75, %v618, %v617
    %v620 = vrot.slane %v591, 4
    %v621 = vsel %vm78, %v620, %v619
    %v622 = vrot.slane %v592, 3
    %v623 = vsel %vm81, %v622, %v621
    %v624 = vrot.slane %v593, 2
    %v625 = vsel %vm84, %v624, %v623
    %v626 = vrot.slane %v594, 1
    %v627 = vsel %vm87, %v626, %v625
    %v628 = vsel %vm89, %v627, 0
    %630 = vmatprep.subr.mxu0 0.0
    %631 = vmatpush1.msra.mxu0 %v596
    %632 = vmatprep.subr.mxu0 0.0
    %633 = vmatpush1.msra.mxu0 %v597
    %634 = vmatprep.subr.mxu0 0.0
    %635 = vmatpush1.msra.mxu0 0.0
    %636 = vmatprep.subr.mxu0 0.0
    %637 = vmatpush1.msra.mxu0 0.0
    %638 = vmatprep.subr.mxu0 0.0
    %639 = vmatpush1.msra.mxu0 0.0
    %640 = vmatprep.subr.mxu0 0.0
    %641 = vmatpush1.msra.mxu0 0.0
    %642 = vmatprep.subr.mxu0 0.0
    %643 = vmatpush1.msra.mxu0 0.0
    %644 = vmatprep.subr.mxu0 0.0
    %645 = vmatpush1.msra.mxu0 0.0
    %646 = vmatprep.subr.mxu0 0.0
    %647 = vmatpush1.msra.mxu0 0.0
    %648 = vmatprep.subr.mxu0 0.0
    %649 = vmatpush1.msra.mxu0 0.0
    %650 = vmatprep.subr.mxu0 0.0
    %651 = vmatpush1.msra.mxu0 0.0
    %652 = vmatprep.subr.mxu0 0.0
    %653 = vmatpush1.msra.mxu0 0.0
    %654 = vmatprep.subr.mxu0 0.0
    %655 = vmatpush1.msra.mxu0 0.0
    %656 = vmatprep.subr.mxu0 0.0
    %657 = vmatpush1.msra.mxu0 0.0
    %658 = vmatprep.subr.mxu0 0.0
    %659 = vmatpush1.msra.mxu0 0.0
    %660 = vmatprep.subr.mxu0 0.0
    %661 = vmatpush1.msra.mxu0 0.0
    %662 = vmatprep.subr.mxu0 0.0
    %663 = vmatpush1.msra.mxu0 0.0
    %664 = vmatprep.subr.mxu0 0.0
    %665 = vmatpush1.msra.mxu0 0.0
    %666 = vmatprep.subr.mxu0 0.0
    %667 = vmatpush1.msra.mxu0 0.0
    %668 = vmatprep.subr.mxu0 0.0
    %669 = vmatpush1.msra.mxu0 0.0
    %670 = vmatprep.subr.mxu0 0.0
    %671 = vmatpush1.msra.mxu0 0.0
    %672 = vmatprep.subr.mxu0 0.0
    %673 = vmatpush1.msra.mxu0 0.0
    %674 = vmatprep.subr.mxu0 0.0
    %675 = vmatpush1.msra.mxu0 0.0
    %676 = vmatprep.subr.mxu0 0.0
    %677 = vmatpush1.msra.mxu0 0.0
    %678 = vmatprep.subr.mxu0 0.0
    %679 = vmatpush1.msra.mxu0 0.0
    %680 = vmatprep.subr.mxu0 0.0
    %681 = vmatpush1.msra.mxu0 0.0
    %682 = vmatprep.subr.mxu0 0.0
    %683 = vmatpush1.msra.mxu0 0.0
    %684 = vmatprep.subr.mxu0 0.0
    %685 = vmatpush1.msra.mxu0 0.0
    %686 = vmatprep.subr.mxu0 0.0
    %687 = vmatpush1.msra.mxu0 0.0
    %688 = vmatprep.subr.mxu0 0.0
    %689 = vmatpush1.msra.mxu0 0.0
    %690 = vmatprep.subr.mxu0 0.0
    %691 = vmatpush1.msra.mxu0 0.0
    %692 = vmatprep.subr.mxu0 0.0
    %693 = vmatpush1.msra.mxu0 0.0
    %694 = vmatprep.mubr.f32.mxu0 0.0
    %695 = vmatmul.mubr.f32.gmra.mrb[0].mxu0 %v628
    %v696 = vpop.f32.mrb[0].mxu0
    %v697 = vadd.f32 %v604, %v696
    %v698 = vpop.f32.mrb[0].mxu0
    %699 = vdwg.mxu0
    %v701 = vcombine.high %v697, %v697
    %v703 = vunpack.c.l.s4 1966171168
    %v704 = vunpack.c.0.s8 %v703
    %v705 = vlaneseq
    %v706 = vshrl.u32 %v705, 7
    %v707 = vsub.s32 %v704, %v706
    %v708 = vrot.slane %v697, %v707
    %v710 = vunpack.c.l.s4 1966171168
    %v711 = vunpack.c.0.s8 %v710
    %v712 = vlaneseq
    %v713 = vshrl.u32 %v712, 7
    %v714 = vsub.s32 %v711, %v713
    %v715 = vrot.slane %v701, %v714
    %v716 = vcombine.high %v708, %v708
    %v717 = vcombine.high %v715, %v715
    %v719 = vunpack.c.l.s4 1966171168
    %v720 = vunpack.c.0.s8 %v719
    %v721 = vlaneseq
    %v722 = vshrl.u32 %v721, 7
    %v723 = vsub.s32 %v720, %v722
    %v724 = vrot.slane %v708, %v723
    %v726 = vunpack.c.l.s4 1966171168
    %v727 = vunpack.c.0.s8 %v726
    %v728 = vlaneseq
    %v729 = vshrl.u32 %v728, 7
    %v730 = vsub.s32 %v727, %v729
    %v731 = vrot.slane %v715, %v730
    %v733 = vunpack.c.l.s4 1966171168
    %v734 = vunpack.c.0.s8 %v733
    %v735 = vlaneseq
    %v736 = vshrl.u32 %v735, 7
    %v737 = vsub.s32 %v734, %v736
    %v738 = vrot.slane %v716, %v737
    %v740 = vunpack.c.l.s4 1966171168
    %v741 = vunpack.c.0.s8 %v740
    %v742 = vlaneseq
    %v743 = vshrl.u32 %v742, 7
    %v744 = vsub.s32 %v741, %v743
    %v745 = vrot.slane %v717, %v744
    %v746 = vcombine.high %v724, %v724
    %v747 = vcombine.high %v731, %v731
    %v748 = vcombine.high %v738, %v738
    %v749 = vcombine.high %v745, %v745
    %758 = vst.msk [vmem:[#allocation7 + $0x3] sm:$0x1] %vm220, %v724
    %759 = vst.msk [vmem:[#allocation7 + $0x7] sm:$0x1] %vm220, %v738
    %760 = vst.msk [vmem:[#allocation7 + $0xb] sm:$0x1] %vm220, %v746
    %761 = vst.msk [vmem:[#allocation7 + $0xf] sm:$0x1] %vm220, %v748
    %762 = vst.msk [vmem:[#allocation7 + $0x13] sm:$0x1] %vm220, %v731
    %763 = vst.msk [vmem:[#allocation7 + $0x17] sm:$0x1] %vm220, %v745
    %764 = vst.msk [vmem:[#allocation7 + $0x1b] sm:$0x1] %vm220, %v747
    %765 = vst.msk [vmem:[#allocation7 + $0x1f] sm:$0x1] %vm220, %v749
    // Predicated region
    $region22: #{tpu_custom_call.1} parent=1 // pred_check
      _
    $region23: #{tpu_custom_call.1} parent=1 // pred_check_branch
      %767 = sbr.rel (0) target = $region25
    $region24: #{tpu_custom_call.1} parent=1 // pred_region
      %s769 = ssub.s32 512, 512
      %770 = vsyncadd [#allocation4], %s769
      %s771 = sshll.u32 [#allocation7], 4
      %s772 = int_to_ptr.vmem [resolvable:$true] %s771
      %777 = dma.vmem_to_hbm [thread:$0]  %s772, 512, %s3, [#allocation4], 64, 64, 4
    $region25: #{tpu_custom_call.1} parent=1 // pred_fallthru
      _
    // Predicated region
    $region26: #{tpu_custom_call.1} parent=1 // pred_check
      _
    $region27: #{tpu_custom_call.1} parent=1 // pred_check_branch
      %779 = sbr.rel (0) target = $region29
    $region28: #{tpu_custom_call.1} parent=1 // pred_region
      %780 = dma.done [#allocation4], 512
    $region29: #{tpu_custom_call.1} parent=1 // pred_fallthru
      _
    %781 = vsyncpa [#allocation3], 1
    %782 = vsyncpa [#allocation6], 1
    %783 = vsyncpa [#allocation4], 1

</llo_original>
